<compile_context>
chip_gen: v5e
topology: v5e:2x2
jax: 0.10.0
libtpu: 0.0.40
codegen_flags: <defaults>
</compile_context>

<pallas_src>
import functools
import math

import jax
import jax.numpy as jnp
from jax.experimental import pallas as pl
from jax.experimental.pallas import tpu as pltpu


def _round_up(x, m):
    return ((x + m - 1) // m) * m


def _fused_gcn_kernel(*refs, apply_prior1, apply_prior2, has_prior, out_dim):
    if has_prior:
        (x_ref, w1_ref, b1_ref, w2_ref, b2_ref, adj_ref, prior_ref,
         o_ref, h_ref) = refs
    else:
        x_ref, w1_ref, b1_ref, w2_ref, b2_ref, adj_ref, o_ref, h_ref = refs
        prior_ref = None

    adj = adj_ref[...]  # bf16 (N_pad, N_pad) -- cast once on the HBM side

    def mxu(a, b):
        # bf16 MXU operands, f32 accumulation.
        return jnp.dot(a.astype(jnp.bfloat16), b.astype(jnp.bfloat16),
                       preferred_element_type=jnp.float32)

    # ---- Layer 1: support = X @ W1 ; h = A @ support ; (prior) ; +b1 ; ReLU ----
    s1 = mxu(x_ref[...], w1_ref[...])          # (N_pad, hid_pad) f32
    h = mxu(adj, s1)                           # (N_pad, hid_pad) f32
    if apply_prior1:
        h = prior_ref[...] * h
    h = h + b1_ref[...]
    h = jnp.maximum(h, 0.0)
    # dropout: inference-mode identity.
    h_ref[...] = h                             # intermediate stays in VMEM scratch

    # ---- Layer 2: support = h @ W2 ; out = A @ support ; (prior) ; +b2 ---------
    s2 = mxu(h_ref[...], w2_ref[...])          # (N_pad, out_pad) f32
    out = mxu(adj, s2)                         # (N_pad, out_pad) f32
    if apply_prior2:
        out = prior_ref[...] * out
    out = out + b2_ref[...]

    # ---- masked log_softmax over the valid (unpadded) class columns ------------
    col = jax.lax.broadcasted_iota(jnp.int32, out.shape, 1)
    valid = col < out_dim
    out = jnp.where(valid, out, jnp.float32(-1e30))
    m = jnp.max(out, axis=1, keepdims=True)
    e = jnp.where(valid, jnp.exp(out - m), 0.0)
    lse = m + jnp.log(jnp.sum(e, axis=1, keepdims=True))
    o_ref[...] = out - lse


@jax.jit
def b_gcns_net_forward(params, feature, adjacency, prior):
    n, in_dim = feature.shape
    hid = params["w1"].shape[1]
    out_dim = params["w2"].shape[1]
    p_dim = prior.shape[1]

    apply_prior1 = (hid == p_dim)      # static (shape-derived)
    apply_prior2 = (out_dim == p_dim)  # static
    has_prior = apply_prior1 or apply_prior2

    LANE, SUB = 128, 8
    n_pad = _round_up(n, SUB)
    in_pad = _round_up(in_dim, LANE)
    hid_pad = _round_up(hid, LANE)
    out_pad = _round_up(out_dim, LANE)

    def pad2(a, rows, cols):
        return jnp.pad(a, ((0, rows - a.shape[0]), (0, cols - a.shape[1])))

    x_p = pad2(feature.astype(jnp.float32), n_pad, in_pad)
    w1_p = pad2(params["w1"], in_pad, hid_pad)
    b1_p = jnp.pad(params["b1"], (0, hid_pad - hid)).reshape(1, hid_pad)
    w2_p = pad2(params["w2"], hid_pad, out_pad)
    b2_p = jnp.pad(params["b2"], (0, out_pad - out_dim)).reshape(1, out_pad)
    # bf16 adjacency on the HBM side: dominant operand, halves its bytes.
    adj_p = pad2(adjacency.astype(jnp.float32), n_pad, n_pad).astype(jnp.bfloat16)

    args = [x_p, w1_p, b1_p, w2_p, b2_p, adj_p]
    if has_prior:
        prior_lanes = hid_pad if apply_prior1 else out_pad
        args.append(pad2(prior.astype(jnp.float32), n_pad, prior_lanes))

    kernel = functools.partial(
        _fused_gcn_kernel,
        apply_prior1=apply_prior1,
        apply_prior2=apply_prior2,
        has_prior=has_prior,
        out_dim=out_dim,
    )

    out_p = pl.pallas_call(
        kernel,
        out_shape=jax.ShapeDtypeStruct((n_pad, out_pad), jnp.float32),
        in_specs=[pl.BlockSpec(memory_space=pltpu.MemorySpace.VMEM)] * len(args),
        out_specs=pl.BlockSpec(memory_space=pltpu.MemorySpace.VMEM),
        scratch_shapes=[pltpu.VMEM((n_pad, hid_pad), jnp.float32)],
    )(*args)

    return out_p[:n, :out_dim]


def init_params(key, input_dim, hidden_dim, output_dim):
    """Mirrors GraphConvolution.reset_parameters: uniform(-stdv, stdv), stdv=1/sqrt(out_dim)."""
    k1, k2, k3, k4 = jax.random.split(key, 4)
    stdv1 = 1.0 / math.sqrt(hidden_dim)
    stdv2 = 1.0 / math.sqrt(output_dim)
    return {
        "w1": jax.random.uniform(k1, (input_dim, hidden_dim), jnp.float32, -stdv1, stdv1),
        "b1": jax.random.uniform(k2, (hidden_dim,), jnp.float32, -stdv1, stdv1),
        "w2": jax.random.uniform(k3, (hidden_dim, output_dim), jnp.float32, -stdv2, stdv2),
        "b2": jax.random.uniform(k4, (output_dim,), jnp.float32, -stdv2, stdv2),
    }


def _reference(params, feature, adjacency, prior, *, bf16_matmul):
    """Plain-JAX reference of the same forward (eval mode)."""
    if bf16_matmul:
        def dot(a, b):
            return jnp.dot(a.astype(jnp.bfloat16), b.astype(jnp.bfloat16),
                           preferred_element_type=jnp.float32)
    else:
        def dot(a, b):
            return jnp.dot(a, b, precision=jax.lax.Precision.HIGHEST)

    def layer(x, w, b):
        out = dot(adjacency, dot(x, w))
        if out.shape[1] == prior.shape[1]:
            out = prior * out
        return out + b

    h = jax.nn.relu(layer(feature, params["w1"], params["b1"]))
    h = layer(h, params["w2"], params["b2"])
    return jax.nn.log_softmax(h, axis=1)


if __name__ == "__main__":
    N, INPUT_DIM, HIDDEN_DIM, OUTPUT_DIM = 8, 16, 32, 8

    key = jax.random.PRNGKey(0)
    kp, kf, ka, kpr = jax.random.split(key, 4)

    params = init_params(kp, INPUT_DIM, HIDDEN_DIM, OUTPUT_DIM)

    feature = jax.random.normal(kf, (N, INPUT_DIM), jnp.float32)

    # Symmetric, row-normalized dense adjacency (stands in for torch.sparse adjacency).
    a_raw = (jax.random.uniform(ka, (N, N)) > 0.5).astype(jnp.float32)
    adj = a_raw + a_raw.T + jnp.eye(N, dtype=jnp.float32)
    adj = adj / jnp.sum(adj, axis=1, keepdims=True)

    prior = jax.random.uniform(kpr, (N, OUTPUT_DIM), jnp.float32)

    out = b_gcns_net_forward(params, feature, adj, prior)
    out = jax.block_until_ready(out)
    assert out.shape == (N, OUTPUT_DIM)

    # Tight check against a reference using the same bf16-MXU / f32-accumulate math.
    ref_q = _reference(params, feature, adj, prior, bf16_matmul=True)
    assert jnp.allclose(out, ref_q, atol=1e-4, rtol=1e-4), "mismatch vs bf16-matched reference"

    # Loose check against a full-f32 reference (bf16 MXU quantization tolerance).
    ref_f32 = _reference(params, feature, adj, prior, bf16_matmul=False)
    assert jnp.allclose(out, ref_f32, atol=2e-2, rtol=2e-2), "mismatch vs f32 reference"

    print("KERNEL_OK")
</pallas_src>

<mosaic_0001>
module attributes {stable_mosaic.version = 11 : i64} {
  func.func @_fused_gcn_kernel(%arg0: memref<8x128xf32, #tpu.memory_space<vmem>>, %arg1: memref<128x128xf32, #tpu.memory_space<vmem>>, %arg2: memref<1x128xf32, #tpu.memory_space<vmem>>, %arg3: memref<128x128xf32, #tpu.memory_space<vmem>>, %arg4: memref<1x128xf32, #tpu.memory_space<vmem>>, %arg5: memref<8x8xbf16, #tpu.memory_space<vmem>>, %arg6: memref<8x128xf32, #tpu.memory_space<vmem>>, %arg7: memref<8x128xf32, #tpu.memory_space<vmem>>, %arg8: memref<8x128xf32, #tpu.memory_space<vmem>>) attributes {dimension_semantics = [], scalar_prefetch = 0 : i64, scratch_operands = 1 : i64, tpu.core_type = #tpu.core_type<tc>} {
    %c0 = arith.constant 0 : index
    %c0_0 = arith.constant 0 : index
    %0 = vector.load %arg5[%c0, %c0_0] : memref<8x8xbf16, #tpu.memory_space<vmem>>, vector<8x8xbf16>
    %c0_1 = arith.constant 0 : index
    %c0_2 = arith.constant 0 : index
    %1 = vector.load %arg0[%c0_1, %c0_2] : memref<8x128xf32, #tpu.memory_space<vmem>>, vector<8x128xf32>
    %c0_3 = arith.constant 0 : index
    %c0_4 = arith.constant 0 : index
    %2 = vector.load %arg1[%c0_3, %c0_4] : memref<128x128xf32, #tpu.memory_space<vmem>>, vector<128x128xf32>
    %3 = arith.truncf %1 : vector<8x128xf32> to vector<8x128xbf16>
    %4 = arith.truncf %2 : vector<128x128xf32> to vector<128x128xbf16>
    %cst = arith.constant dense<0.000000e+00> : vector<8x128xf32>
    %5 = tpu.matmul %3, %4, %cst {dimension_numbers = #tpu.dot_dimension_numbers<[1], [0], [0], [1], [0, 0, 1, 1], [], []>} : vector<8x128xbf16>, vector<128x128xbf16>, vector<8x128xf32> -> vector<8x128xf32>
    %6 = arith.truncf %5 : vector<8x128xf32> to vector<8x128xbf16>
    %cst_5 = arith.constant dense<0.000000e+00> : vector<8x128xf32>
    %7 = tpu.matmul %0, %6, %cst_5 {dimension_numbers = #tpu.dot_dimension_numbers<[1], [0], [0], [1], [0, 0, 1, 1], [], []>} : vector<8x8xbf16>, vector<8x128xbf16>, vector<8x128xf32> -> vector<8x128xf32>
    %c0_6 = arith.constant 0 : index
    %c0_7 = arith.constant 0 : index
    %8 = vector.load %arg2[%c0_6, %c0_7] : memref<1x128xf32, #tpu.memory_space<vmem>>, vector<1x128xf32>
    %9 = vector.broadcast %8 : vector<1x128xf32> to vector<8x128xf32>
    %10 = arith.addf %7, %9 : vector<8x128xf32>
    %cst_8 = arith.constant 0.000000e+00 : f32
    %11 = vector.broadcast %cst_8 : f32 to vector<8x128xf32>
    %12 = arith.maximumf %10, %11 : vector<8x128xf32>
    %c0_9 = arith.constant 0 : index
    %c0_10 = arith.constant 0 : index
    %13 = vector.load %arg8[%c0_9, %c0_10] : memref<8x128xf32, #tpu.memory_space<vmem>>, vector<8x128xf32>
    tpu.vector_store %arg8[%c0_9, %c0_10], %12 {strides = array<i32>} : memref<8x128xf32, #tpu.memory_space<vmem>>, vector<8x128xf32>,
    %c0_11 = arith.constant 0 : index
    %c0_12 = arith.constant 0 : index
    %14 = vector.load %arg8[%c0_11, %c0_12] : memref<8x128xf32, #tpu.memory_space<vmem>>, vector<8x128xf32>
    %c0_13 = arith.constant 0 : index
    %c0_14 = arith.constant 0 : index
    %15 = vector.load %arg3[%c0_13, %c0_14] : memref<128x128xf32, #tpu.memory_space<vmem>>, vector<128x128xf32>
    %16 = arith.truncf %14 : vector<8x128xf32> to vector<8x128xbf16>
    %17 = arith.truncf %15 : vector<128x128xf32> to vector<128x128xbf16>
    %cst_15 = arith.constant dense<0.000000e+00> : vector<8x128xf32>
    %18 = tpu.matmul %16, %17, %cst_15 {dimension_numbers = #tpu.dot_dimension_numbers<[1], [0], [0], [1], [0, 0, 1, 1], [], []>} : vector<8x128xbf16>, vector<128x128xbf16>, vector<8x128xf32> -> vector<8x128xf32>
    %19 = arith.truncf %18 : vector<8x128xf32> to vector<8x128xbf16>
    %cst_16 = arith.constant dense<0.000000e+00> : vector<8x128xf32>
    %20 = tpu.matmul %0, %19, %cst_16 {dimension_numbers = #tpu.dot_dimension_numbers<[1], [0], [0], [1], [0, 0, 1, 1], [], []>} : vector<8x8xbf16>, vector<8x128xbf16>, vector<8x128xf32> -> vector<8x128xf32>
    %c0_17 = arith.constant 0 : index
    %c0_18 = arith.constant 0 : index
    %21 = vector.load %arg6[%c0_17, %c0_18] : memref<8x128xf32, #tpu.memory_space<vmem>>, vector<8x128xf32>
    %22 = arith.mulf %21, %20 : vector<8x128xf32>
    %c0_19 = arith.constant 0 : index
    %c0_20 = arith.constant 0 : index
    %23 = vector.load %arg4[%c0_19, %c0_20] : memref<1x128xf32, #tpu.memory_space<vmem>>, vector<1x128xf32>
    %24 = vector.broadcast %23 : vector<1x128xf32> to vector<8x128xf32>
    %25 = arith.addf %22, %24 : vector<8x128xf32>
    %26 = tpu.iota {dimensions = array<i32: 1>} : vector<8x128xi32>
    %c8_i32 = arith.constant 8 : i32
    %27 = vector.broadcast %c8_i32 : i32 to vector<8x128xi32>
    %28 = arith.cmpi slt, %26, %27 : vector<8x128xi32>
    %cst_21 = arith.constant -1.000000e+30 : f32
    %29 = vector.broadcast %cst_21 : f32 to vector<8x128xf32>
    %30 = arith.select %28, %25, %29 : vector<8x128xi1>, vector<8x128xf32>
    %cst_22 = arith.constant dense<0xFF800000> : vector<8xf32>
    %31 = vector.multi_reduction <maximumf>, %30, %cst_22 [1] : vector<8x128xf32> to vector<8xf32>
    %32 = vector.shape_cast %31 : vector<8xf32> to vector<8x1xf32>
    %33 = vector.broadcast %32 : vector<8x1xf32> to vector<8x128xf32>
    %34 = arith.subf %30, %33 : vector<8x128xf32>
    %35 = math.exp %34 : vector<8x128xf32>
    %cst_23 = arith.constant 0.000000e+00 : f32
    %36 = vector.broadcast %cst_23 : f32 to vector<8x128xf32>
    %37 = arith.select %28, %35, %36 : vector<8x128xi1>, vector<8x128xf32>
    %cst_24 = arith.constant dense<0.000000e+00> : vector<8xf32>
    %38 = vector.multi_reduction <add>, %37, %cst_24 [1] : vector<8x128xf32> to vector<8xf32>
    %39 = vector.shape_cast %38 : vector<8xf32> to vector<8x1xf32>
    %40 = math.log %39 : vector<8x1xf32>
    %41 = arith.addf %32, %40 : vector<8x1xf32>
    %42 = vector.broadcast %41 : vector<8x1xf32> to vector<8x128xf32>
    %43 = arith.subf %30, %42 : vector<8x128xf32>
    %c0_25 = arith.constant 0 : index
    %c0_26 = arith.constant 0 : index
    %44 = vector.load %arg7[%c0_25, %c0_26] : memref<8x128xf32, #tpu.memory_space<vmem>>, vector<8x128xf32>
    tpu.vector_store %arg7[%c0_25, %c0_26], %43 {strides = array<i32>} : memref<8x128xf32, #tpu.memory_space<vmem>>, vector<8x128xf32>,
    return
  }
}

</mosaic_0001>

<llo_original>
// kernel: b_gcns_net_forward.1
$region0: #{b_gcns_net_forward.1}
  #allocation0 [shape = 'u32[]', space=smem, size = 0x4, offset = 0x4, fixed_abs, tag = 'smem constant byte address 0x4 - core index']
  #allocation1 [shape = 'u32[72,128]{1,0:T(1,128)}', space=vmem, size = 0x9000, scoped, tag = 'internal scratch']
  #allocation2 [shape = 'f32[8,128]{1,0:T(8,128)}', space=vmem, size = 0x1000, scoped, tag = 'scratch operand']
  %s0 = inlined_call_operand.vmem [shape: f32[8,128], index: 0, kind: input, shape index: {}]
  %s1 = inlined_call_operand.vmem [shape: f32[128,128], index: 1, kind: input, shape index: {}]
  %s2 = inlined_call_operand.vmem [shape: f32[1,128], index: 2, kind: input, shape index: {}]
  %s3 = inlined_call_operand.vmem [shape: f32[128,128], index: 3, kind: input, shape index: {}]
  %s4 = inlined_call_operand.vmem [shape: f32[1,128], index: 4, kind: input, shape index: {}]
  %s5 = inlined_call_operand.vmem [shape: bf16[8,8], index: 5, kind: input, shape index: {}]
  %s6 = inlined_call_operand.vmem [shape: f32[8,128], index: 6, kind: input, shape index: {}]
  %s7 = inlined_call_operand.hbm [shape: f32[8,128], index: 7, kind: output, shape index: {}]
  %s8 = sld [smem:[#allocation0]]
  $region38: #{b_gcns_net_forward.1} parent=0
    _
  %s10 = ssub.s32 1, %s8
  %s11 = scalar_select 0, %s10, %s8
  $region1: #{b_gcns_net_forward.1} parent=0
    #allocation3 [shape = 'u8[4096]{0}', space=vmem, size = 0x1000, scoped, tag = 'output window, operand 0, single buffered']
    #allocation4 [shape = 's32[1]{0}', space=sflag, size = 0x4, scoped, tag = 'scoped memory for b_gcns_net_forward.1']
    %12 = vsyncpa [#allocation4], 0
    // Predicated region
    $region2: #{b_gcns_net_forward.1} parent=1 // pred_check
      _
    $region3: #{b_gcns_net_forward.1} parent=1 // pred_check_branch
      %14 = sbr.rel (0) target = $region5
    $region4: #{b_gcns_net_forward.1} parent=1 // pred_region
      _
    $region5: #{b_gcns_net_forward.1} parent=1 // pred_fallthru
      _
    // Predicated region
    $region6: #{b_gcns_net_forward.1} parent=1 // pred_check
      _
    $region7: #{b_gcns_net_forward.1} parent=1 // pred_check_branch
      %16 = sbr.rel (0) target = $region9
    $region8: #{b_gcns_net_forward.1} parent=1 // pred_region
      _
    $region9: #{b_gcns_net_forward.1} parent=1 // pred_fallthru
      _
    // Predicated region
    $region10: #{b_gcns_net_forward.1} parent=1 // pred_check
      _
    $region11: #{b_gcns_net_forward.1} parent=1 // pred_check_branch
      %18 = sbr.rel (0) target = $region13
    $region12: #{b_gcns_net_forward.1} parent=1 // pred_region
      _
    $region13: #{b_gcns_net_forward.1} parent=1 // pred_fallthru
      _
    // Predicated region
    $region14: #{b_gcns_net_forward.1} parent=1 // pred_check
      _
    $region15: #{b_gcns_net_forward.1} parent=1 // pred_check_branch
      %20 = sbr.rel (0) target = $region17
    $region16: #{b_gcns_net_forward.1} parent=1 // pred_region
      _
    $region17: #{b_gcns_net_forward.1} parent=1 // pred_fallthru
      _
    // Predicated region
    $region18: #{b_gcns_net_forward.1} parent=1 // pred_check
      _
    $region19: #{b_gcns_net_forward.1} parent=1 // pred_check_branch
      %22 = sbr.rel (0) target = $region21
    $region20: #{b_gcns_net_forward.1} parent=1 // pred_region
      _
    $region21: #{b_gcns_net_forward.1} parent=1 // pred_fallthru
      _
    // Predicated region
    $region22: #{b_gcns_net_forward.1} parent=1 // pred_check
      _
    $region23: #{b_gcns_net_forward.1} parent=1 // pred_check_branch
      %24 = sbr.rel (0) target = $region25
    $region24: #{b_gcns_net_forward.1} parent=1 // pred_region
      _
    $region25: #{b_gcns_net_forward.1} parent=1 // pred_fallthru
      _
    // Predicated region
    $region26: #{b_gcns_net_forward.1} parent=1 // pred_check
      _
    $region27: #{b_gcns_net_forward.1} parent=1 // pred_check_branch
      %26 = sbr.rel (0) target = $region29
    $region28: #{b_gcns_net_forward.1} parent=1 // pred_region
      _
    $region29: #{b_gcns_net_forward.1} parent=1 // pred_fallthru
      _
    %v28 = vld [vmem:[%s5] sm:$0xf]
    %v29 = vld [vmem:[%s0] sm:$0xff]
    %v30 = vld [vmem:[%s1] sm:$0xff]
    %v31 = vld [vmem:[%s1 + $0x8] sm:$0xff]
    %v32 = vld [vmem:[%s1 + $0x10] sm:$0xff]
    %v33 = vld [vmem:[%s1 + $0x18] sm:$0xff]
    %v34 = vld [vmem:[%s1 + $0x20] sm:$0xff]
    %v35 = vld [vmem:[%s1 + $0x28] sm:$0xff]
    %v36 = vld [vmem:[%s1 + $0x30] sm:$0xff]
    %v37 = vld [vmem:[%s1 + $0x38] sm:$0xff]
    %v38 = vld [vmem:[%s1 + $0x40] sm:$0xff]
    %v39 = vld [vmem:[%s1 + $0x48] sm:$0xff]
    %v40 = vld [vmem:[%s1 + $0x50] sm:$0xff]
    %v41 = vld [vmem:[%s1 + $0x58] sm:$0xff]
    %v42 = vld [vmem:[%s1 + $0x60] sm:$0xff]
    %v43 = vld [vmem:[%s1 + $0x68] sm:$0xff]
    %v44 = vld [vmem:[%s1 + $0x70] sm:$0xff]
    %v45 = vld [vmem:[%s1 + $0x78] sm:$0xff]
    %v46 = vpack.c.bf16 %v29, %v29
    %v47 = vpack.c.bf16 %v31, %v30
    %v48 = vpack.c.bf16 %v33, %v32
    %v49 = vpack.c.bf16 %v35, %v34
    %v50 = vpack.c.bf16 %v37, %v36
    %v51 = vpack.c.bf16 %v39, %v38
    %v52 = vpack.c.bf16 %v41, %v40
    %v53 = vpack.c.bf16 %v43, %v42
    %v54 = vpack.c.bf16 %v45, %v44
    %55 = vmatpush.bf16.msra.mxu0 %v54
    %56 = vmatpush.bf16.msra.mxu0 %v53
    %57 = vmatpush.bf16.msra.mxu0 %v52
    %58 = vmatpush.bf16.msra.mxu0 %v51
    %59 = vmatpush.bf16.msra.mxu0 %v50
    %60 = vmatpush.bf16.msra.mxu0 %v49
    %61 = vmatpush.bf16.msra.mxu0 %v48
    %62 = vmatpush.bf16.msra.mxu0 %v47
    %63 = vmatmul.bf16.gmra.mxu0 %v46
    %v64 = vpop.f32.mrf.mxu0
    %v65 = vadd.f32 0.0, %v64
    %v66 = vpop.f32.mrf.mxu0
    %67 = vdwg.mxu0
    %v68 = vpack.c.bf16 %v65, %v65
    %v69 = vld [vmem:[%s2] sm:$0x1]
    %v71 = vperm.slane %v69, 0
    %vm73 = vcmask 64512
    %v75 = vsel %vm73, %v28, 0
    %vm77 = vcmask 1043456
    %v79 = vsel %vm77, %v68, 0
    %81 = vmatpush.bf16.msra.mxu0 0
    %82 = vmatpush.bf16.msra.mxu0 0
    %83 = vmatpush.bf16.msra.mxu0 0
    %84 = vmatpush.bf16.msra.mxu0 0
    %85 = vmatpush.bf16.msra.mxu0 0
    %86 = vmatpush.bf16.msra.mxu0 0
    %87 = vmatpush.bf16.msra.mxu0 0
    %88 = vmatpush.bf16.msra.mxu0 %v79
    %89 = vmatmul.bf16.gmra.mxu0 %v75
    %v90 = vpop.f32.mrf.mxu0
    %v91 = vadd.f32 %v71, %v90
    %v92 = vpop.f32.mrf.mxu0
    %93 = vdwg.mxu0
    %v94 = vmax.f32 %v91, 0.0
    %95 = vst [vmem:[#allocation2] sm:$0xff] %v94
    %v96 = vld [vmem:[#allocation2] sm:$0xff]
    %v97 = vld [vmem:[%s3] sm:$0xff]
    %v98 = vld [vmem:[%s3 + $0x8] sm:$0xff]
    %v99 = vld [vmem:[%s3 + $0x10] sm:$0xff]
    %v100 = vld [vmem:[%s3 + $0x18] sm:$0xff]
    %v101 = vld [vmem:[%s3 + $0x20] sm:$0xff]
    %v102 = vld [vmem:[%s3 + $0x28] sm:$0xff]
    %v103 = vld [vmem:[%s3 + $0x30] sm:$0xff]
    %v104 = vld [vmem:[%s3 + $0x38] sm:$0xff]
    %v105 = vld [vmem:[%s3 + $0x40] sm:$0xff]
    %v106 = vld [vmem:[%s3 + $0x48] sm:$0xff]
    %v107 = vld [vmem:[%s3 + $0x50] sm:$0xff]
    %v108 = vld [vmem:[%s3 + $0x58] sm:$0xff]
    %v109 = vld [vmem:[%s3 + $0x60] sm:$0xff]
    %v110 = vld [vmem:[%s3 + $0x68] sm:$0xff]
    %v111 = vld [vmem:[%s3 + $0x70] sm:$0xff]
    %v112 = vld [vmem:[%s3 + $0x78] sm:$0xff]
    %v113 = vpack.c.bf16 %v96, %v96
    %v114 = vpack.c.bf16 %v98, %v97
    %v115 = vpack.c.bf16 %v100, %v99
    %v116 = vpack.c.bf16 %v102, %v101
    %v117 = vpack.c.bf16 %v104, %v103
    %v118 = vpack.c.bf16 %v106, %v105
    %v119 = vpack.c.bf16 %v108, %v107
    %v120 = vpack.c.bf16 %v110, %v109
    %v121 = vpack.c.bf16 %v112, %v111
    %122 = vmatpush.bf16.msra.mxu0 %v121
    %123 = vmatpush.bf16.msra.mxu0 %v120
    %124 = vmatpush.bf16.msra.mxu0 %v119
    %125 = vmatpush.bf16.msra.mxu0 %v118
    %126 = vmatpush.bf16.msra.mxu0 %v117
    %127 = vmatpush.bf16.msra.mxu0 %v116
    %128 = vmatpush.bf16.msra.mxu0 %v115
    %129 = vmatpush.bf16.msra.mxu0 %v114
    %130 = vmatmul.bf16.gmra.mxu0 %v113
    %v131 = vpop.f32.mrf.mxu0
    %v132 = vadd.f32 0.0, %v131
    %v133 = vpop.f32.mrf.mxu0
    %134 = vdwg.mxu0
    %v135 = vpack.c.bf16 %v132, %v132
    %v137 = vsel %vm77, %v135, 0
    %139 = vmatpush.bf16.msra.mxu0 0
    %140 = vmatpush.bf16.msra.mxu0 0
    %141 = vmatpush.bf16.msra.mxu0 0
    %142 = vmatpush.bf16.msra.mxu0 0
    %143 = vmatpush.bf16.msra.mxu0 0
    %144 = vmatpush.bf16.msra.mxu0 0
    %145 = vmatpush.bf16.msra.mxu0 0
    %146 = vmatpush.bf16.msra.mxu0 %v137
    %147 = vmatmul.bf16.gmra.mxu0 %v75
    %v148 = vpop.f32.mrf.mxu0
    %v149 = vadd.f32 0.0, %v148
    %v150 = vpop.f32.mrf.mxu0
    %151 = vdwg.mxu0
    %v152 = vld [vmem:[%s6] sm:$0xff]
    %v153 = vmul.f32 %v152, %v149
    %v154 = vld [vmem:[%s4] sm:$0x1]
    %v156 = vperm.slane %v154, 0
    %v158 = vadd.f32 %v153, %v156
    %v159 = vlaneseq
    %v160 = vand.u32 %v159, 127
    %vm161 = vcmp.lt.s32.totalorder %v160, 8
    %v162 = vsel %vm161, %v158, -1e+30
    %163 = vmax.xlane.f32.xlu0 %v162
    %v164 = vpop.xlane.xlu0 %163
    %v165 = vsub.f32 %v162, %v164
    %v166 = vmul.f32 %v165, 1.442695
    %v167 = vpow.pop %v166
    %v168 = vsel %vm161, %v167, 0.0
    %169 = vadd.xlane.f32.xlu0 %v168
    %v170 = vpop.xlane.xlu0 %169
    %v171 = vlog2.pop %v170
    %v172 = vmul.f32 %v171, 0.6931472
    %v173 = vadd.f32 %v164, %v172
    %v174 = vsub.f32 %v162, %v173
    %175 = vst [vmem:[#allocation3] sm:$0xff] %v174
    // Predicated region
    $region30: #{b_gcns_net_forward.1} parent=1 // pred_check
      _
    $region31: #{b_gcns_net_forward.1} parent=1 // pred_check_branch
      %177 = sbr.rel (0) target = $region33
    $region32: #{b_gcns_net_forward.1} parent=1 // pred_region
      %179 = vsyncadd [#allocation4], 0
      %s181 = sshll.u32 [#allocation3], 4
      %s182 = int_to_ptr.vmem [resolvable:$true] %s181
      %s183 = sshll.u32 %s7, 4
      %s184 = int_to_ptr.hbm [resolvable:$true] %s183
      %186 = dma.vmem_to_hbm [thread:$0]  %s182, 128, %s184, [#allocation4]
    $region33: #{b_gcns_net_forward.1} parent=1 // pred_fallthru
      _
    // Predicated region
    $region34: #{b_gcns_net_forward.1} parent=1 // pred_check
      _
    $region35: #{b_gcns_net_forward.1} parent=1 // pred_check_branch
      %188 = sbr.rel (0) target = $region37
    $region36: #{b_gcns_net_forward.1} parent=1 // pred_region
      %190 = dma.done [#allocation4], 128
    $region37: #{b_gcns_net_forward.1} parent=1 // pred_fallthru
      _
    %191 = vsyncpa [#allocation4], 1

</llo_original>
